<compile_context>
chip_gen: v5e
topology: v5e:2x2
jax: 0.10.0
libtpu: 0.0.40
codegen_flags: <defaults>
</compile_context>

<pallas_src>
import jax
import jax.numpy as jnp
import numpy as np
from jax import lax
from jax.experimental import pallas as pl
from jax.experimental.pallas import tpu as pltpu


def _gelu_erf(z):
    """Exact-erf GELU via A&S 7.1.26 rational approx (|abs err| < 1.5e-7).

    exp() and the reciprocal go to the EUP slot (pl.reciprocal approx=True), keeping
    VALU work to the polynomial itself.
    """
    a1, a2, a3, a4, a5 = 0.254829592, -0.284496736, 1.421413741, -1.453152027, 1.061405429
    p = 0.3275911
    x = z * 0.7071067811865476            # z / sqrt(2)
    ax = jnp.abs(x)
    t = pl.reciprocal(1.0 + p * ax, approx=True)
    poly = ((((a5 * t + a4) * t + a3) * t + a2) * t + a1) * t
    e = 1.0 - poly * jnp.exp(-ax * ax)
    erf = jnp.where(x >= 0.0, e, -e)
    half_z = 0.5 * z
    return half_z + half_z * erf


def _make_kernel(N, C, H, W):
    S = H * W
    inv_cnt = 1.0 / float(N * S)
    # Tap order t = (dh+1)*3 + (dw+1); flat-spatial offset of each tap.
    offsets = [dh * W + dw for dh in (-1, 0, 1) for dw in (-1, 0, 1)]

    def _shift_lanes(y, off):
        # out[..., s] = y[..., (s + off) % S].  Wrapped lanes (image borders / row wrap)
        # carry garbage but are zeroed by the combined tap mask.  This is the
        # jnp.roll(y, -off) / pltpu.roll(y, (-off) % S) lane rotation: it keeps y in
        # vregs and routes the shuffle to the XLU instead of a VMEM scratch round-trip.
        k = off % S
        if k == 0:
            return y
        return jnp.concatenate([y[..., k:], y[..., :k]], axis=-1)

    def kernel(x_ref, wblk_ref, wd_ref, mask_ref, fold_ref, gamma_ref, beta_ref, o_ref):
        # x_ref:     (N*C, S)    packed input; rows = (n, c), lanes = flat (h, w)
        # wblk_ref:  (N*C, N*C)  kron(I_N, W1^T) block-diagonal 1x1 weight
        # wd_ref:    (9, N*C, 1) depthwise taps tiled over n, t = (dh+1)*3 + (dw+1)
        # mask_ref:  (9, 1, S)   combined vertical+horizontal tap-validity masks
        # fold_ref:  (N*C, N*C)  kron(1_{NxN}, I_C): per-channel sum across samples
        # gamma_ref: (N*C, 1), beta_ref: (N*C, 1)  BN affine params tiled over n
        # o_ref:     (N*C, S)

        # ---- 1x1 pointwise conv: ONE MXU contraction over all batch samples ----
        y = jnp.dot(wblk_ref[...], x_ref[...], preferred_element_type=jnp.float32)

        # ---- 3x3 depthwise conv: 9 lane-rotated taps with precombined coefficients ----
        # Coefficients hoisted out of the tap loop (JAX does not CSE broadcast_in_dim).
        coeffs = [wd_ref[t] * mask_ref[t] for t in range(9)]      # each (N*C, S)
        z = coeffs[4] * y                                         # center tap, off == 0
        for t, off in enumerate(offsets):
            if off == 0:
                continue
            z = z + coeffs[t] * _shift_lanes(y, off)

        # ---- BatchNorm2d (training forward): per-channel stats over (N, H, W) ----
        # fold @ z sums across samples per channel (result already broadcast back to every
        # packed row); the lane reduce finishes the spatial sum.  MXU is idle here, so the
        # cross-sample fold is free and avoids sublane reshapes/tiles.
        mean = jnp.sum(jnp.dot(fold_ref[...], z, preferred_element_type=jnp.float32),
                       axis=-1, keepdims=True) * inv_cnt          # (N*C, 1)
        zc = z - mean
        var = jnp.sum(jnp.dot(fold_ref[...], zc * zc, preferred_element_type=jnp.float32),
                      axis=-1, keepdims=True) * inv_cnt           # biased, as torch
        scale = lax.rsqrt(var + 1e-5) * gamma_ref[...]            # (N*C, 1)
        zn = zc * scale + beta_ref[...]

        # ---- GELU + single full-lane-width (256-lane) store ----
        o_ref[...] = _gelu_erf(zn).astype(o_ref.dtype)

    return kernel


def depthwise_conv_block(x_nchw, w1, wd, gamma, beta):
    """x_nchw: (N, C, H, W) f32 -> (N, C, H, W) f32 (in_channels == out_channels)."""
    N, C, H, W = x_nchw.shape
    S = H * W
    NC = N * C

    # Packed activations: rows = (n, c), lanes = flat spatial.  Contiguous reshape only.
    x_packed = x_nchw.reshape(NC, S)

    # 1x1 conv as one block-diagonal matmul: y = kron(I_N, w1^T) @ x_packed.
    wblk = jnp.kron(jnp.eye(N, dtype=jnp.float32), jnp.transpose(w1))        # (NC, NC)

    # Depthwise taps tiled over n so they line up with the packed rows: (9, NC, 1).
    wd_rows = jnp.tile(wd.reshape(9, C), (1, N))[:, :, None]

    # Combined per-tap validity masks (vertical AND horizontal), host-side numpy: (9,1,S).
    h_idx = np.repeat(np.arange(H), W)
    w_idx = np.tile(np.arange(W), H)
    mask9 = np.stack(
        [((h_idx + dh >= 0) & (h_idx + dh < H) & (w_idx + dw >= 0) & (w_idx + dw < W))
         for dh in (-1, 0, 1) for dw in (-1, 0, 1)],
        axis=0).astype(np.float32)[:, None, :]
    mask9 = jnp.asarray(mask9)

    # Cross-sample fold matrix for BN stats: (fold @ v)[n*C + c] = sum_n' v[n'*C + c].
    fold = jnp.asarray(np.kron(np.ones((N, N), np.float32), np.eye(C, dtype=np.float32)))

    gamma_rows = jnp.tile(gamma.reshape(C), (N,))[:, None]                    # (NC, 1)
    beta_rows = jnp.tile(beta.reshape(C), (N,))[:, None]                      # (NC, 1)

    out_flat = pl.pallas_call(
        _make_kernel(N, C, H, W),
        out_shape=jax.ShapeDtypeStruct((NC, S), jnp.float32),
        grid=(1,),
        in_specs=[
            pl.BlockSpec((NC, S), lambda i: (0, 0)),
            pl.BlockSpec((NC, NC), lambda i: (0, 0)),
            pl.BlockSpec((9, NC, 1), lambda i: (0, 0, 0)),
            pl.BlockSpec((9, 1, S), lambda i: (0, 0, 0)),
            pl.BlockSpec((NC, NC), lambda i: (0, 0)),
            pl.BlockSpec((NC, 1), lambda i: (0, 0)),
            pl.BlockSpec((NC, 1), lambda i: (0, 0)),
        ],
        out_specs=pl.BlockSpec((NC, S), lambda i: (0, 0)),
        compiler_params=pltpu.CompilerParams(dimension_semantics=("arbitrary",)),
    )(x_packed, wblk, wd_rows, mask9, fold, gamma_rows, beta_rows)

    return out_flat.reshape(N, C, H, W)


def _reference(x_nchw, w1, wd, gamma, beta):
    """Pure-JAX reference of the PyTorch forward (NCHW), full f32 precision."""
    C = w1.shape[1]
    y = jnp.einsum('nchw,cd->ndhw', x_nchw, w1, precision=lax.Precision.HIGHEST)
    w_dw = jnp.transpose(wd, (2, 0, 1))[:, None, :, :]          # (C, 1, 3, 3)
    z = lax.conv_general_dilated(
        y, w_dw, window_strides=(1, 1), padding=((1, 1), (1, 1)),
        dimension_numbers=('NCHW', 'OIHW', 'NCHW'),
        feature_group_count=C, precision=lax.Precision.HIGHEST)
    mean = z.mean(axis=(0, 2, 3), keepdims=True)
    var = ((z - mean) ** 2).mean(axis=(0, 2, 3), keepdims=True)
    zn = (z - mean) * lax.rsqrt(var + 1e-5)
    zn = zn * gamma.reshape(1, -1, 1, 1) + beta.reshape(1, -1, 1, 1)
    return 0.5 * zn * (1.0 + lax.erf(zn / jnp.sqrt(2.0)))


if __name__ == "__main__":
    # in_channels == out_channels == 4, so the grouped 3x3 conv is a true depthwise conv
    # (groups == channels), matching the module's constraints.
    N, C, H, W = 2, 4, 16, 16

    key = jax.random.PRNGKey(0)
    k_x, k_w1, k_wd = jax.random.split(key, 3)
    x = jax.random.normal(k_x, (N, C, H, W), jnp.float32)
    w1 = jax.random.normal(k_w1, (C, C), jnp.float32) * 0.3      # 1x1 conv weight (Cin, Cout)
    wd = jax.random.normal(k_wd, (3, 3, C), jnp.float32) * 0.3   # depthwise 3x3 weight
    gamma = jnp.ones((1, C), jnp.float32)                        # BatchNorm2d default init
    beta = jnp.zeros((1, C), jnp.float32)

    out = jax.block_until_ready(depthwise_conv_block(x, w1, wd, gamma, beta))
    ref = jax.block_until_ready(_reference(x, w1, wd, gamma, beta))

    # 2e-3 tolerance: A&S erf (1.5e-7) + EUP approx reciprocal in the GELU leave
    # ~1e-4-scale deviations from the exact-erf reference; 2e-3 gives margin.
    np.testing.assert_allclose(np.asarray(out), np.asarray(ref), rtol=2e-3, atol=2e-3)
    print("KERNEL_OK")
</pallas_src>

<mosaic_0001>
module attributes {stable_mosaic.version = 11 : i64} {
  func.func @kernel(%arg0: i32, %arg1: memref<8x256xf32, #tpu.memory_space<vmem>>, %arg2: memref<8x8xf32, #tpu.memory_space<vmem>>, %arg3: memref<9x8x1xf32, #tpu.memory_space<vmem>>, %arg4: memref<9x1x256xf32, #tpu.memory_space<vmem>>, %arg5: memref<8x8xf32, #tpu.memory_space<vmem>>, %arg6: memref<8x1xf32, #tpu.memory_space<vmem>>, %arg7: memref<8x1xf32, #tpu.memory_space<vmem>>, %arg8: memref<8x256xf32, #tpu.memory_space<vmem>>) attributes {dimension_semantics = [#tpu.dimension_semantics<arbitrary>], iteration_bounds = array<i64: 1>, scalar_prefetch = 0 : i64, scratch_operands = 0 : i64, tpu.core_type = #tpu.core_type<tc>, window_params = [{pipeline_mode = #tpu.pipeline_mode<synchronous>, transform_indices = @transform_0, window_bounds = array<i64: 8, 256>}, {pipeline_mode = #tpu.pipeline_mode<synchronous>, transform_indices = @transform_1, window_bounds = array<i64: 8, 8>}, {pipeline_mode = #tpu.pipeline_mode<synchronous>, transform_indices = @transform_2, window_bounds = array<i64: 9, 8, 1>}, {pipeline_mode = #tpu.pipeline_mode<synchronous>, transform_indices = @transform_3, window_bounds = array<i64: 9, 1, 256>}, {pipeline_mode = #tpu.pipeline_mode<synchronous>, transform_indices = @transform_4, window_bounds = array<i64: 8, 8>}, {pipeline_mode = #tpu.pipeline_mode<synchronous>, transform_indices = @transform_5, window_bounds = array<i64: 8, 1>}, {pipeline_mode = #tpu.pipeline_mode<synchronous>, transform_indices = @transform_6, window_bounds = array<i64: 8, 1>}, {pipeline_mode = #tpu.pipeline_mode<synchronous>, transform_indices = @transform_7, window_bounds = array<i64: 8, 256>}]} {
    %c0 = arith.constant 0 : index
    %c0_0 = arith.constant 0 : index
    %0 = vector.load %arg2[%c0, %c0_0] : memref<8x8xf32, #tpu.memory_space<vmem>>, vector<8x8xf32>
    %c0_1 = arith.constant 0 : index
    %c0_2 = arith.constant 0 : index
    %1 = vector.load %arg1[%c0_1, %c0_2] : memref<8x256xf32, #tpu.memory_space<vmem>>, vector<8x256xf32>
    %cst = arith.constant dense<0.000000e+00> : vector<8x256xf32>
    %2 = tpu.matmul %0, %1, %cst {dimension_numbers = #tpu.dot_dimension_numbers<[1], [0], [0], [1], [0, 0, 1, 1], [], []>} : vector<8x8xf32>, vector<8x256xf32>, vector<8x256xf32> -> vector<8x256xf32>
    %c0_3 = arith.constant 0 : index
    %c0_4 = arith.constant 0 : index
    %c0_5 = arith.constant 0 : index
    %3 = vector.load %arg3[%c0_3, %c0_4, %c0_5] : memref<9x8x1xf32, #tpu.memory_space<vmem>>, vector<1x8x1xf32>
    %4 = vector.shape_cast %3 : vector<1x8x1xf32> to vector<8x1xf32>
    %c0_6 = arith.constant 0 : index
    %c0_7 = arith.constant 0 : index
    %c0_8 = arith.constant 0 : index
    %5 = vector.load %arg4[%c0_6, %c0_7, %c0_8] : memref<9x1x256xf32, #tpu.memory_space<vmem>>, vector<1x1x256xf32>
    %6 = vector.shape_cast %5 : vector<1x1x256xf32> to vector<1x256xf32>
    %7 = vector.broadcast %4 : vector<8x1xf32> to vector<8x256xf32>
    %8 = vector.broadcast %6 : vector<1x256xf32> to vector<8x256xf32>
    %9 = arith.mulf %7, %8 : vector<8x256xf32>
    %c1 = arith.constant 1 : index
    %c0_9 = arith.constant 0 : index
    %c0_10 = arith.constant 0 : index
    %10 = vector.load %arg3[%c1, %c0_9, %c0_10] : memref<9x8x1xf32, #tpu.memory_space<vmem>>, vector<1x8x1xf32>
    %11 = vector.shape_cast %10 : vector<1x8x1xf32> to vector<8x1xf32>
    %c1_11 = arith.constant 1 : index
    %c0_12 = arith.constant 0 : index
    %c0_13 = arith.constant 0 : index
    %12 = vector.load %arg4[%c1_11, %c0_12, %c0_13] : memref<9x1x256xf32, #tpu.memory_space<vmem>>, vector<1x1x256xf32>
    %13 = vector.shape_cast %12 : vector<1x1x256xf32> to vector<1x256xf32>
    %14 = vector.broadcast %11 : vector<8x1xf32> to vector<8x256xf32>
    %15 = vector.broadcast %13 : vector<1x256xf32> to vector<8x256xf32>
    %16 = arith.mulf %14, %15 : vector<8x256xf32>
    %c2 = arith.constant 2 : index
    %c0_14 = arith.constant 0 : index
    %c0_15 = arith.constant 0 : index
    %17 = vector.load %arg3[%c2, %c0_14, %c0_15] : memref<9x8x1xf32, #tpu.memory_space<vmem>>, vector<1x8x1xf32>
    %18 = vector.shape_cast %17 : vector<1x8x1xf32> to vector<8x1xf32>
    %c2_16 = arith.constant 2 : index
    %c0_17 = arith.constant 0 : index
    %c0_18 = arith.constant 0 : index
    %19 = vector.load %arg4[%c2_16, %c0_17, %c0_18] : memref<9x1x256xf32, #tpu.memory_space<vmem>>, vector<1x1x256xf32>
    %20 = vector.shape_cast %19 : vector<1x1x256xf32> to vector<1x256xf32>
    %21 = vector.broadcast %18 : vector<8x1xf32> to vector<8x256xf32>
    %22 = vector.broadcast %20 : vector<1x256xf32> to vector<8x256xf32>
    %23 = arith.mulf %21, %22 : vector<8x256xf32>
    %c3 = arith.constant 3 : index
    %c0_19 = arith.constant 0 : index
    %c0_20 = arith.constant 0 : index
    %24 = vector.load %arg3[%c3, %c0_19, %c0_20] : memref<9x8x1xf32, #tpu.memory_space<vmem>>, vector<1x8x1xf32>
    %25 = vector.shape_cast %24 : vector<1x8x1xf32> to vector<8x1xf32>
    %c3_21 = arith.constant 3 : index
    %c0_22 = arith.constant 0 : index
    %c0_23 = arith.constant 0 : index
    %26 = vector.load %arg4[%c3_21, %c0_22, %c0_23] : memref<9x1x256xf32, #tpu.memory_space<vmem>>, vector<1x1x256xf32>
    %27 = vector.shape_cast %26 : vector<1x1x256xf32> to vector<1x256xf32>
    %28 = vector.broadcast %25 : vector<8x1xf32> to vector<8x256xf32>
    %29 = vector.broadcast %27 : vector<1x256xf32> to vector<8x256xf32>
    %30 = arith.mulf %28, %29 : vector<8x256xf32>
    %c4 = arith.constant 4 : index
    %c0_24 = arith.constant 0 : index
    %c0_25 = arith.constant 0 : index
    %31 = vector.load %arg3[%c4, %c0_24, %c0_25] : memref<9x8x1xf32, #tpu.memory_space<vmem>>, vector<1x8x1xf32>
    %32 = vector.shape_cast %31 : vector<1x8x1xf32> to vector<8x1xf32>
    %c4_26 = arith.constant 4 : index
    %c0_27 = arith.constant 0 : index
    %c0_28 = arith.constant 0 : index
    %33 = vector.load %arg4[%c4_26, %c0_27, %c0_28] : memref<9x1x256xf32, #tpu.memory_space<vmem>>, vector<1x1x256xf32>
    %34 = vector.shape_cast %33 : vector<1x1x256xf32> to vector<1x256xf32>
    %35 = vector.broadcast %32 : vector<8x1xf32> to vector<8x256xf32>
    %36 = vector.broadcast %34 : vector<1x256xf32> to vector<8x256xf32>
    %37 = arith.mulf %35, %36 : vector<8x256xf32>
    %c5 = arith.constant 5 : index
    %c0_29 = arith.constant 0 : index
    %c0_30 = arith.constant 0 : index
    %38 = vector.load %arg3[%c5, %c0_29, %c0_30] : memref<9x8x1xf32, #tpu.memory_space<vmem>>, vector<1x8x1xf32>
    %39 = vector.shape_cast %38 : vector<1x8x1xf32> to vector<8x1xf32>
    %c5_31 = arith.constant 5 : index
    %c0_32 = arith.constant 0 : index
    %c0_33 = arith.constant 0 : index
    %40 = vector.load %arg4[%c5_31, %c0_32, %c0_33] : memref<9x1x256xf32, #tpu.memory_space<vmem>>, vector<1x1x256xf32>
    %41 = vector.shape_cast %40 : vector<1x1x256xf32> to vector<1x256xf32>
    %42 = vector.broadcast %39 : vector<8x1xf32> to vector<8x256xf32>
    %43 = vector.broadcast %41 : vector<1x256xf32> to vector<8x256xf32>
    %44 = arith.mulf %42, %43 : vector<8x256xf32>
    %c6 = arith.constant 6 : index
    %c0_34 = arith.constant 0 : index
    %c0_35 = arith.constant 0 : index
    %45 = vector.load %arg3[%c6, %c0_34, %c0_35] : memref<9x8x1xf32, #tpu.memory_space<vmem>>, vector<1x8x1xf32>
    %46 = vector.shape_cast %45 : vector<1x8x1xf32> to vector<8x1xf32>
    %c6_36 = arith.constant 6 : index
    %c0_37 = arith.constant 0 : index
    %c0_38 = arith.constant 0 : index
    %47 = vector.load %arg4[%c6_36, %c0_37, %c0_38] : memref<9x1x256xf32, #tpu.memory_space<vmem>>, vector<1x1x256xf32>
    %48 = vector.shape_cast %47 : vector<1x1x256xf32> to vector<1x256xf32>
    %49 = vector.broadcast %46 : vector<8x1xf32> to vector<8x256xf32>
    %50 = vector.broadcast %48 : vector<1x256xf32> to vector<8x256xf32>
    %51 = arith.mulf %49, %50 : vector<8x256xf32>
    %c7 = arith.constant 7 : index
    %c0_39 = arith.constant 0 : index
    %c0_40 = arith.constant 0 : index
    %52 = vector.load %arg3[%c7, %c0_39, %c0_40] : memref<9x8x1xf32, #tpu.memory_space<vmem>>, vector<1x8x1xf32>
    %53 = vector.shape_cast %52 : vector<1x8x1xf32> to vector<8x1xf32>
    %c7_41 = arith.constant 7 : index
    %c0_42 = arith.constant 0 : index
    %c0_43 = arith.constant 0 : index
    %54 = vector.load %arg4[%c7_41, %c0_42, %c0_43] : memref<9x1x256xf32, #tpu.memory_space<vmem>>, vector<1x1x256xf32>
    %55 = vector.shape_cast %54 : vector<1x1x256xf32> to vector<1x256xf32>
    %56 = vector.broadcast %53 : vector<8x1xf32> to vector<8x256xf32>
    %57 = vector.broadcast %55 : vector<1x256xf32> to vector<8x256xf32>
    %58 = arith.mulf %56, %57 : vector<8x256xf32>
    %c8 = arith.constant 8 : index
    %c0_44 = arith.constant 0 : index
    %c0_45 = arith.constant 0 : index
    %59 = vector.load %arg3[%c8, %c0_44, %c0_45] : memref<9x8x1xf32, #tpu.memory_space<vmem>>, vector<1x8x1xf32>
    %60 = vector.shape_cast %59 : vector<1x8x1xf32> to vector<8x1xf32>
    %c8_46 = arith.constant 8 : index
    %c0_47 = arith.constant 0 : index
    %c0_48 = arith.constant 0 : index
    %61 = vector.load %arg4[%c8_46, %c0_47, %c0_48] : memref<9x1x256xf32, #tpu.memory_space<vmem>>, vector<1x1x256xf32>
    %62 = vector.shape_cast %61 : vector<1x1x256xf32> to vector<1x256xf32>
    %63 = vector.broadcast %60 : vector<8x1xf32> to vector<8x256xf32>
    %64 = vector.broadcast %62 : vector<1x256xf32> to vector<8x256xf32>
    %65 = arith.mulf %63, %64 : vector<8x256xf32>
    %66 = arith.mulf %37, %2 : vector<8x256xf32>
    %67 = vector.extract_strided_slice %2 {offsets = [0, 239], sizes = [8, 17], strides = [1, 1]} : vector<8x256xf32> to vector<8x17xf32>
    %68 = vector.extract_strided_slice %2 {offsets = [0, 0], sizes = [8, 239], strides = [1, 1]} : vector<8x256xf32> to vector<8x239xf32>
    %69 = tpu.concatenate %67, %68 in 1 : vector<8x17xf32>, vector<8x239xf32> -> vector<8x256xf32>
    %70 = arith.mulf %9, %69 : vector<8x256xf32>
    %71 = arith.addf %66, %70 : vector<8x256xf32>
    %72 = vector.extract_strided_slice %2 {offsets = [0, 240], sizes = [8, 16], strides = [1, 1]} : vector<8x256xf32> to vector<8x16xf32>
    %73 = vector.extract_strided_slice %2 {offsets = [0, 0], sizes = [8, 240], strides = [1, 1]} : vector<8x256xf32> to vector<8x240xf32>
    %74 = tpu.concatenate %72, %73 in 1 : vector<8x16xf32>, vector<8x240xf32> -> vector<8x256xf32>
    %75 = arith.mulf %16, %74 : vector<8x256xf32>
    %76 = arith.addf %71, %75 : vector<8x256xf32>
    %77 = vector.extract_strided_slice %2 {offsets = [0, 241], sizes = [8, 15], strides = [1, 1]} : vector<8x256xf32> to vector<8x15xf32>
    %78 = vector.extract_strided_slice %2 {offsets = [0, 0], sizes = [8, 241], strides = [1, 1]} : vector<8x256xf32> to vector<8x241xf32>
    %79 = tpu.concatenate %77, %78 in 1 : vector<8x15xf32>, vector<8x241xf32> -> vector<8x256xf32>
    %80 = arith.mulf %23, %79 : vector<8x256xf32>
    %81 = arith.addf %76, %80 : vector<8x256xf32>
    %82 = vector.extract_strided_slice %2 {offsets = [0, 255], sizes = [8, 1], strides = [1, 1]} : vector<8x256xf32> to vector<8x1xf32>
    %83 = vector.extract_strided_slice %2 {offsets = [0, 0], sizes = [8, 255], strides = [1, 1]} : vector<8x256xf32> to vector<8x255xf32>
    %84 = tpu.concatenate %82, %83 in 1 : vector<8x1xf32>, vector<8x255xf32> -> vector<8x256xf32>
    %85 = arith.mulf %30, %84 : vector<8x256xf32>
    %86 = arith.addf %81, %85 : vector<8x256xf32>
    %87 = vector.extract_strided_slice %2 {offsets = [0, 1], sizes = [8, 255], strides = [1, 1]} : vector<8x256xf32> to vector<8x255xf32>
    %88 = vector.extract_strided_slice %2 {offsets = [0, 0], sizes = [8, 1], strides = [1, 1]} : vector<8x256xf32> to vector<8x1xf32>
    %89 = tpu.concatenate %87, %88 in 1 : vector<8x255xf32>, vector<8x1xf32> -> vector<8x256xf32>
    %90 = arith.mulf %44, %89 : vector<8x256xf32>
    %91 = arith.addf %86, %90 : vector<8x256xf32>
    %92 = vector.extract_strided_slice %2 {offsets = [0, 15], sizes = [8, 241], strides = [1, 1]} : vector<8x256xf32> to vector<8x241xf32>
    %93 = vector.extract_strided_slice %2 {offsets = [0, 0], sizes = [8, 15], strides = [1, 1]} : vector<8x256xf32> to vector<8x15xf32>
    %94 = tpu.concatenate %92, %93 in 1 : vector<8x241xf32>, vector<8x15xf32> -> vector<8x256xf32>
    %95 = arith.mulf %51, %94 : vector<8x256xf32>
    %96 = arith.addf %91, %95 : vector<8x256xf32>
    %97 = vector.extract_strided_slice %2 {offsets = [0, 16], sizes = [8, 240], strides = [1, 1]} : vector<8x256xf32> to vector<8x240xf32>
    %98 = vector.extract_strided_slice %2 {offsets = [0, 0], sizes = [8, 16], strides = [1, 1]} : vector<8x256xf32> to vector<8x16xf32>
    %99 = tpu.concatenate %97, %98 in 1 : vector<8x240xf32>, vector<8x16xf32> -> vector<8x256xf32>
    %100 = arith.mulf %58, %99 : vector<8x256xf32>
    %101 = arith.addf %96, %100 : vector<8x256xf32>
    %102 = vector.extract_strided_slice %2 {offsets = [0, 17], sizes = [8, 239], strides = [1, 1]} : vector<8x256xf32> to vector<8x239xf32>
    %103 = vector.extract_strided_slice %2 {offsets = [0, 0], sizes = [8, 17], strides = [1, 1]} : vector<8x256xf32> to vector<8x17xf32>
    %104 = tpu.concatenate %102, %103 in 1 : vector<8x239xf32>, vector<8x17xf32> -> vector<8x256xf32>
    %105 = arith.mulf %65, %104 : vector<8x256xf32>
    %106 = arith.addf %101, %105 : vector<8x256xf32>
    %c0_49 = arith.constant 0 : index
    %c0_50 = arith.constant 0 : index
    %107 = vector.load %arg5[%c0_49, %c0_50] : memref<8x8xf32, #tpu.memory_space<vmem>>, vector<8x8xf32>
    %cst_51 = arith.constant dense<0.000000e+00> : vector<8x256xf32>
    %108 = tpu.matmul %107, %106, %cst_51 {dimension_numbers = #tpu.dot_dimension_numbers<[1], [0], [0], [1], [0, 0, 1, 1], [], []>} : vector<8x8xf32>, vector<8x256xf32>, vector<8x256xf32> -> vector<8x256xf32>
    %cst_52 = arith.constant dense<0.000000e+00> : vector<8xf32>
    %109 = vector.multi_reduction <add>, %108, %cst_52 [1] : vector<8x256xf32> to vector<8xf32>
    %110 = vector.shape_cast %109 : vector<8xf32> to vector<8x1xf32>
    %cst_53 = arith.constant 0.001953125 : f32
    %111 = vector.broadcast %cst_53 : f32 to vector<8x1xf32>
    %112 = arith.mulf %110, %111 : vector<8x1xf32>
    %113 = vector.broadcast %112 : vector<8x1xf32> to vector<8x256xf32>
    %114 = arith.subf %106, %113 : vector<8x256xf32>
    %c0_54 = arith.constant 0 : index
    %c0_55 = arith.constant 0 : index
    %115 = vector.load %arg5[%c0_54, %c0_55] : memref<8x8xf32, #tpu.memory_space<vmem>>, vector<8x8xf32>
    %116 = arith.mulf %114, %114 : vector<8x256xf32>
    %cst_56 = arith.constant dense<0.000000e+00> : vector<8x256xf32>
    %117 = tpu.matmul %115, %116, %cst_56 {dimension_numbers = #tpu.dot_dimension_numbers<[1], [0], [0], [1], [0, 0, 1, 1], [], []>} : vector<8x8xf32>, vector<8x256xf32>, vector<8x256xf32> -> vector<8x256xf32>
    %cst_57 = arith.constant dense<0.000000e+00> : vector<8xf32>
    %118 = vector.multi_reduction <add>, %117, %cst_57 [1] : vector<8x256xf32> to vector<8xf32>
    %119 = vector.shape_cast %118 : vector<8xf32> to vector<8x1xf32>
    %cst_58 = arith.constant 0.001953125 : f32
    %120 = vector.broadcast %cst_58 : f32 to vector<8x1xf32>
    %121 = arith.mulf %119, %120 : vector<8x1xf32>
    %cst_59 = arith.constant 9.99999974E-6 : f32
    %122 = vector.broadcast %cst_59 : f32 to vector<8x1xf32>
    %123 = arith.addf %121, %122 : vector<8x1xf32>
    %124 = math.rsqrt %123 : vector<8x1xf32>
    %c0_60 = arith.constant 0 : index
    %c0_61 = arith.constant 0 : index
    %125 = vector.load %arg6[%c0_60, %c0_61] : memref<8x1xf32, #tpu.memory_space<vmem>>, vector<8x1xf32>
    %126 = arith.mulf %124, %125 : vector<8x1xf32>
    %127 = vector.broadcast %126 : vector<8x1xf32> to vector<8x256xf32>
    %128 = arith.mulf %114, %127 : vector<8x256xf32>
    %c0_62 = arith.constant 0 : index
    %c0_63 = arith.constant 0 : index
    %129 = vector.load %arg7[%c0_62, %c0_63] : memref<8x1xf32, #tpu.memory_space<vmem>>, vector<8x1xf32>
    %130 = vector.broadcast %129 : vector<8x1xf32> to vector<8x256xf32>
    %131 = arith.addf %128, %130 : vector<8x256xf32>
    %cst_64 = arith.constant 0.707106769 : f32
    %132 = vector.broadcast %cst_64 : f32 to vector<8x256xf32>
    %133 = arith.mulf %131, %132 : vector<8x256xf32>
    %134 = math.absf %133 : vector<8x256xf32>
    %cst_65 = arith.constant 0.327591091 : f32
    %135 = vector.broadcast %cst_65 : f32 to vector<8x256xf32>
    %136 = arith.mulf %135, %134 : vector<8x256xf32>
    %cst_66 = arith.constant 1.000000e+00 : f32
    %137 = vector.broadcast %cst_66 : f32 to vector<8x256xf32>
    %138 = arith.addf %137, %136 : vector<8x256xf32>
    %139 = tpu.reciprocal %138 {approx = true} : vector<8x256xf32> -> vector<8x256xf32>
    %cst_67 = arith.constant 1.06140542 : f32
    %140 = vector.broadcast %cst_67 : f32 to vector<8x256xf32>
    %141 = arith.mulf %140, %139 : vector<8x256xf32>
    %cst_68 = arith.constant -1.45315206 : f32
    %142 = vector.broadcast %cst_68 : f32 to vector<8x256xf32>
    %143 = arith.addf %141, %142 : vector<8x256xf32>
    %144 = arith.mulf %143, %139 : vector<8x256xf32>
    %cst_69 = arith.constant 1.42141378 : f32
    %145 = vector.broadcast %cst_69 : f32 to vector<8x256xf32>
    %146 = arith.addf %144, %145 : vector<8x256xf32>
    %147 = arith.mulf %146, %139 : vector<8x256xf32>
    %cst_70 = arith.constant -0.284496725 : f32
    %148 = vector.broadcast %cst_70 : f32 to vector<8x256xf32>
    %149 = arith.addf %147, %148 : vector<8x256xf32>
    %150 = arith.mulf %149, %139 : vector<8x256xf32>
    %cst_71 = arith.constant 0.254829586 : f32
    %151 = vector.broadcast %cst_71 : f32 to vector<8x256xf32>
    %152 = arith.addf %150, %151 : vector<8x256xf32>
    %153 = arith.mulf %152, %139 : vector<8x256xf32>
    %cst_72 = arith.constant 0.000000e+00 : f32
    %154 = vector.broadcast %cst_72 : f32 to vector<8x256xf32>
    %155 = arith.subf %154, %134 : vector<8x256xf32>
    %156 = arith.mulf %155, %134 : vector<8x256xf32>
    %157 = math.exp %156 : vector<8x256xf32>
    %158 = arith.mulf %153, %157 : vector<8x256xf32>
    %cst_73 = arith.constant 1.000000e+00 : f32
    %159 = vector.broadcast %cst_73 : f32 to vector<8x256xf32>
    %160 = arith.subf %159, %158 : vector<8x256xf32>
    %cst_74 = arith.constant 0.000000e+00 : f32
    %161 = vector.broadcast %cst_74 : f32 to vector<8x256xf32>
    %162 = arith.cmpf oge, %133, %161 : vector<8x256xf32>
    %cst_75 = arith.constant 0.000000e+00 : f32
    %163 = vector.broadcast %cst_75 : f32 to vector<8x256xf32>
    %164 = arith.subf %163, %160 : vector<8x256xf32>
    %165 = arith.select %162, %160, %164 : vector<8x256xi1>, vector<8x256xf32>
    %cst_76 = arith.constant 5.000000e-01 : f32
    %166 = vector.broadcast %cst_76 : f32 to vector<8x256xf32>
    %167 = arith.mulf %166, %131 : vector<8x256xf32>
    %168 = arith.mulf %167, %165 : vector<8x256xf32>
    %169 = arith.addf %167, %168 : vector<8x256xf32>
    %c0_77 = arith.constant 0 : index
    %c0_78 = arith.constant 0 : index
    %170 = vector.load %arg8[%c0_77, %c0_78] : memref<8x256xf32, #tpu.memory_space<vmem>>, vector<8x256xf32>
    tpu.vector_store %arg8[%c0_77, %c0_78], %169 {strides = array<i32>} : memref<8x256xf32, #tpu.memory_space<vmem>>, vector<8x256xf32>,
    return
  }
  func.func @transform_0(%arg0: i32) -> (i32, i32) {
    %c0_i32 = arith.constant 0 : i32
    %c0_i32_0 = arith.constant 0 : i32
    %c0_i32_1 = arith.constant 0 : i32
    return %c0_i32, %c0_i32_0 : i32, i32
  }
  func.func @transform_1(%arg0: i32) -> (i32, i32) {
    %c0_i32 = arith.constant 0 : i32
    %c0_i32_0 = arith.constant 0 : i32
    %c0_i32_1 = arith.constant 0 : i32
    return %c0_i32, %c0_i32_0 : i32, i32
  }
  func.func @transform_2(%arg0: i32) -> (i32, i32, i32) {
    %c0_i32 = arith.constant 0 : i32
    %c0_i32_0 = arith.constant 0 : i32
    %c0_i32_1 = arith.constant 0 : i32
    %c0_i32_2 = arith.constant 0 : i32
    return %c0_i32, %c0_i32_0, %c0_i32_1 : i32, i32, i32
  }
  func.func @transform_3(%arg0: i32) -> (i32, i32, i32) {
    %c0_i32 = arith.constant 0 : i32
    %c0_i32_0 = arith.constant 0 : i32
    %c0_i32_1 = arith.constant 0 : i32
    %c0_i32_2 = arith.constant 0 : i32
    return %c0_i32, %c0_i32_0, %c0_i32_1 : i32, i32, i32
  }
  func.func @transform_4(%arg0: i32) -> (i32, i32) {
    %c0_i32 = arith.constant 0 : i32
    %c0_i32_0 = arith.constant 0 : i32
    %c0_i32_1 = arith.constant 0 : i32
    return %c0_i32, %c0_i32_0 : i32, i32
  }
  func.func @transform_5(%arg0: i32) -> (i32, i32) {
    %c0_i32 = arith.constant 0 : i32
    %c0_i32_0 = arith.constant 0 : i32
    %c0_i32_1 = arith.constant 0 : i32
    return %c0_i32, %c0_i32_0 : i32, i32
  }
  func.func @transform_6(%arg0: i32) -> (i32, i32) {
    %c0_i32 = arith.constant 0 : i32
    %c0_i32_0 = arith.constant 0 : i32
    %c0_i32_1 = arith.constant 0 : i32
    return %c0_i32, %c0_i32_0 : i32, i32
  }
  func.func @transform_7(%arg0: i32) -> (i32, i32) {
    %c0_i32 = arith.constant 0 : i32
    %c0_i32_0 = arith.constant 0 : i32
    %c0_i32_1 = arith.constant 0 : i32
    return %c0_i32, %c0_i32_0 : i32, i32
  }
}

</mosaic_0001>

<llo_original>
// kernel: tpu_custom_call.1
$region0: #{tpu_custom_call.1}
  #allocation0 [shape = 'u32[]', space=smem, size = 0x4, offset = 0x4, fixed_abs, tag = 'smem constant byte address 0x4 - core index']
  #allocation1 [shape = 'u32[72,128]{1,0:T(1,128)}', space=vmem, size = 0x9000, scoped, tag = 'internal scratch']
  %s0 = inlined_call_operand.vmem [shape: f32[8,256], index: 0, kind: input, shape index: {}]
  %s1 = inlined_call_operand.vmem [shape: f32[8,8], index: 1, kind: input, shape index: {}]
  %s2 = inlined_call_operand.vmem [shape: f32[9,8,1], index: 2, kind: input, shape index: {}]
  %s3 = inlined_call_operand.vmem [shape: f32[9,1,256], index: 3, kind: input, shape index: {}]
  %s4 = inlined_call_operand.vmem [shape: f32[8,8], index: 4, kind: input, shape index: {}]
  %s5 = inlined_call_operand.vmem [shape: f32[8,1], index: 5, kind: input, shape index: {}]
  %s6 = inlined_call_operand.vmem [shape: f32[8,1], index: 6, kind: input, shape index: {}]
  %s7 = inlined_call_operand.hbm [shape: f32[8,256], index: 7, kind: output, shape index: {}]
  %s8 = sld [smem:[#allocation0]]
  $region38: #{tpu_custom_call.1} parent=0
    _
  %s10 = ssub.s32 1, %s8
  %s11 = scalar_select 0, %s10, %s8
  $region1: #{tpu_custom_call.1} parent=0
    #allocation2 [shape = 'u8[8192]{0}', space=vmem, size = 0x2000, scoped, tag = 'output window, operand 0, single buffered']
    #allocation3 [shape = 's32[1]{0}', space=sflag, size = 0x4, scoped, tag = 'scoped memory for tpu_custom_call.1']
    %12 = vsyncpa [#allocation3], 0
    // Predicated region
    $region2: #{tpu_custom_call.1} parent=1 // pred_check
      _
    $region3: #{tpu_custom_call.1} parent=1 // pred_check_branch
      %14 = sbr.rel (0) target = $region5
    $region4: #{tpu_custom_call.1} parent=1 // pred_region
      _
    $region5: #{tpu_custom_call.1} parent=1 // pred_fallthru
      _
    // Predicated region
    $region6: #{tpu_custom_call.1} parent=1 // pred_check
      _
    $region7: #{tpu_custom_call.1} parent=1 // pred_check_branch
      %16 = sbr.rel (0) target = $region9
    $region8: #{tpu_custom_call.1} parent=1 // pred_region
      _
    $region9: #{tpu_custom_call.1} parent=1 // pred_fallthru
      _
    // Predicated region
    $region10: #{tpu_custom_call.1} parent=1 // pred_check
      _
    $region11: #{tpu_custom_call.1} parent=1 // pred_check_branch
      %18 = sbr.rel (0) target = $region13
    $region12: #{tpu_custom_call.1} parent=1 // pred_region
      _
    $region13: #{tpu_custom_call.1} parent=1 // pred_fallthru
      _
    // Predicated region
    $region14: #{tpu_custom_call.1} parent=1 // pred_check
      _
    $region15: #{tpu_custom_call.1} parent=1 // pred_check_branch
      %20 = sbr.rel (0) target = $region17
    $region16: #{tpu_custom_call.1} parent=1 // pred_region
      _
    $region17: #{tpu_custom_call.1} parent=1 // pred_fallthru
      _
    // Predicated region
    $region18: #{tpu_custom_call.1} parent=1 // pred_check
      _
    $region19: #{tpu_custom_call.1} parent=1 // pred_check_branch
      %22 = sbr.rel (0) target = $region21
    $region20: #{tpu_custom_call.1} parent=1 // pred_region
      _
    $region21: #{tpu_custom_call.1} parent=1 // pred_fallthru
      _
    // Predicated region
    $region22: #{tpu_custom_call.1} parent=1 // pred_check
      _
    $region23: #{tpu_custom_call.1} parent=1 // pred_check_branch
      %24 = sbr.rel (0) target = $region25
    $region24: #{tpu_custom_call.1} parent=1 // pred_region
      _
    $region25: #{tpu_custom_call.1} parent=1 // pred_fallthru
      _
    // Predicated region
    $region26: #{tpu_custom_call.1} parent=1 // pred_check
      _
    $region27: #{tpu_custom_call.1} parent=1 // pred_check_branch
      %26 = sbr.rel (0) target = $region29
    $region28: #{tpu_custom_call.1} parent=1 // pred_region
      _
    $region29: #{tpu_custom_call.1} parent=1 // pred_fallthru
      _
    %v27 = vld [vmem:[%s1] sm:$0xff]
    %v28 = vld [vmem:[%s0] sm:$0xff]
    %v29 = vld [vmem:[%s0 + $0x8] sm:$0xff]
    %vm30 = vcmask 64512
    %v32 = vsel %vm30, %v27, 0
    %34 = vmatpush.msra.mxu0 0.0
    %35 = vmatpush.msra.mxu0 0.0
    %36 = vmatpush.msra.mxu0 0.0
    %37 = vmatpush.msra.mxu0 0.0
    %38 = vmatpush.msra.mxu0 0.0
    %39 = vmatpush.msra.mxu0 0.0
    %40 = vmatpush.msra.mxu0 0.0
    %41 = vmatpush.msra.mxu0 0.0
    %42 = vmatpush.msra.mxu0 0.0
    %43 = vmatpush.msra.mxu0 0.0
    %44 = vmatpush.msra.mxu0 0.0
    %45 = vmatpush.msra.mxu0 0.0
    %46 = vmatpush.msra.mxu0 0.0
    %47 = vmatpush.msra.mxu0 0.0
    %48 = vmatpush.msra.mxu0 0.0
    %49 = vmatpush.msra.mxu0 %v28
    %50 = vmatmul.f32.gmra.mxu0 %v32
    %v51 = vpop.f32.mrf.mxu0
    %v52 = vadd.f32 0.0, %v51
    %53 = vdwg.mxu0
    %54 = vmatpush.msra.mxu0 0.0
    %55 = vmatpush.msra.mxu0 0.0
    %56 = vmatpush.msra.mxu0 0.0
    %57 = vmatpush.msra.mxu0 0.0
    %58 = vmatpush.msra.mxu0 0.0
    %59 = vmatpush.msra.mxu0 0.0
    %60 = vmatpush.msra.mxu0 0.0
    %61 = vmatpush.msra.mxu0 0.0
    %62 = vmatpush.msra.mxu0 0.0
    %63 = vmatpush.msra.mxu0 0.0
    %64 = vmatpush.msra.mxu0 0.0
    %65 = vmatpush.msra.mxu0 0.0
    %66 = vmatpush.msra.mxu0 0.0
    %67 = vmatpush.msra.mxu0 0.0
    %68 = vmatpush.msra.mxu0 0.0
    %69 = vmatpush.msra.mxu0 %v29
    %70 = vmatmul.f32.gmra.mxu0 %v32
    %v71 = vpop.f32.mrf.mxu0
    %v72 = vadd.f32 0.0, %v71
    %73 = vdwg.mxu0
    %v74 = vld [vmem:[%s2] sm:$0xff]
    %v75 = vld [vmem:[%s3] sm:$0x3]
    %77 = vset.pattern.permute.xlu0 0
    %78 = vperm.xlu0 %77, %v74
    %v79 = vpop.permute.xlu0 %78
    %v82 = vperm.slane %v75, 0
    %v83 = vperm.slane %v75, 1
    %v86 = vmul.f32 %v79, %v82
    %v87 = vmul.f32 %v79, %v83
    %s88 = scalar_lea.vmem %s2, 8
    %v89 = vld [vmem:[%s88] sm:$0xff]
    %s90 = scalar_lea.vmem %s3, 2
    %v91 = vld [vmem:[%s90] sm:$0x3]
    %93 = vset.pattern.permute.xlu0 0
    %94 = vperm.xlu0 %93, %v89
    %v95 = vpop.permute.xlu0 %94
    %v98 = vperm.slane %v91, 0
    %v99 = vperm.slane %v91, 1
    %v102 = vmul.f32 %v95, %v98
    %v103 = vmul.f32 %v95, %v99
    %s104 = scalar_lea.vmem %s2, 16
    %v105 = vld [vmem:[%s104] sm:$0xff]
    %s106 = scalar_lea.vmem %s3, 4
    %v107 = vld [vmem:[%s106] sm:$0x3]
    %109 = vset.pattern.permute.xlu0 0
    %110 = vperm.xlu0 %109, %v105
    %v111 = vpop.permute.xlu0 %110
    %v114 = vperm.slane %v107, 0
    %v115 = vperm.slane %v107, 1
    %v118 = vmul.f32 %v111, %v114
    %v119 = vmul.f32 %v111, %v115
    %s120 = scalar_lea.vmem %s2, 24
    %v121 = vld [vmem:[%s120] sm:$0xff]
    %s122 = scalar_lea.vmem %s3, 6
    %v123 = vld [vmem:[%s122] sm:$0x3]
    %125 = vset.pattern.permute.xlu0 0
    %126 = vperm.xlu0 %125, %v121
    %v127 = vpop.permute.xlu0 %126
    %v130 = vperm.slane %v123, 0
    %v131 = vperm.slane %v123, 1
    %v134 = vmul.f32 %v127, %v130
    %v135 = vmul.f32 %v127, %v131
    %s136 = scalar_lea.vmem %s2, 32
    %v137 = vld [vmem:[%s136] sm:$0xff]
    %s138 = scalar_lea.vmem %s3, 8
    %v139 = vld [vmem:[%s138] sm:$0x3]
    %141 = vset.pattern.permute.xlu0 0
    %142 = vperm.xlu0 %141, %v137
    %v143 = vpop.permute.xlu0 %142
    %v146 = vperm.slane %v139, 0
    %v147 = vperm.slane %v139, 1
    %v150 = vmul.f32 %v143, %v146
    %v151 = vmul.f32 %v143, %v147
    %s152 = scalar_lea.vmem %s2, 40
    %v153 = vld [vmem:[%s152] sm:$0xff]
    %s154 = scalar_lea.vmem %s3, 10
    %v155 = vld [vmem:[%s154] sm:$0x3]
    %157 = vset.pattern.permute.xlu0 0
    %158 = vperm.xlu0 %157, %v153
    %v159 = vpop.permute.xlu0 %158
    %v162 = vperm.slane %v155, 0
    %v163 = vperm.slane %v155, 1
    %v166 = vmul.f32 %v159, %v162
    %v167 = vmul.f32 %v159, %v163
    %s168 = scalar_lea.vmem %s2, 48
    %v169 = vld [vmem:[%s168] sm:$0xff]
    %s170 = scalar_lea.vmem %s3, 12
    %v171 = vld [vmem:[%s170] sm:$0x3]
    %173 = vset.pattern.permute.xlu0 0
    %174 = vperm.xlu0 %173, %v169
    %v175 = vpop.permute.xlu0 %174
    %v178 = vperm.slane %v171, 0
    %v179 = vperm.slane %v171, 1
    %v182 = vmul.f32 %v175, %v178
    %v183 = vmul.f32 %v175, %v179
    %s184 = scalar_lea.vmem %s2, 56
    %v185 = vld [vmem:[%s184] sm:$0xff]
    %s186 = scalar_lea.vmem %s3, 14
    %v187 = vld [vmem:[%s186] sm:$0x3]
    %189 = vset.pattern.permute.xlu0 0
    %190 = vperm.xlu0 %189, %v185
    %v191 = vpop.permute.xlu0 %190
    %v194 = vperm.slane %v187, 0
    %v195 = vperm.slane %v187, 1
    %v198 = vmul.f32 %v191, %v194
    %v199 = vmul.f32 %v191, %v195
    %s200 = scalar_lea.vmem %s2, 64
    %v201 = vld [vmem:[%s200] sm:$0xff]
    %s202 = scalar_lea.vmem %s3, 16
    %v203 = vld [vmem:[%s202] sm:$0x3]
    %205 = vset.pattern.permute.xlu0 0
    %206 = vperm.xlu0 %205, %v201
    %v207 = vpop.permute.xlu0 %206
    %v210 = vperm.slane %v203, 0
    %v211 = vperm.slane %v203, 1
    %v214 = vmul.f32 %v207, %v210
    %v215 = vmul.f32 %v207, %v211
    %v216 = vmul.f32 %v150, %v52
    %v217 = vmul.f32 %v151, %v72
    %219 = vrot.lane.b32.xlu0 %v72, 17
    %v220 = vpop.permute.xlu0 %219
    %223 = vrot.lane.b32.xlu0 %v52, 17
    %v224 = vpop.permute.xlu0 %223
    %vm225 = vcmask 138240
    %v226 = vsel %vm225, %v224, %v220
    %v229 = vsel %vm225, %v220, %v224
    %v230 = vmul.f32 %v86, %v229
    %v231 = vmul.f32 %v87, %v226
    %v232 = vadd.f32 %v216, %v230
    %v233 = vadd.f32 %v217, %v231
    %234 = vrot.lane.b32.xlu0 %v72, 16
    %v235 = vpop.permute.xlu0 %234
    %237 = vrot.lane.b32.xlu0 %v52, 16
    %v238 = vpop.permute.xlu0 %237
    %vm239 = vcmask 130048
    %v240 = vsel %vm239, %v238, %v235
    %v243 = vsel %vm239, %v235, %v238
    %v244 = vmul.f32 %v102, %v243
    %v245 = vmul.f32 %v103, %v240
    %v246 = vadd.f32 %v232, %v244
    %v247 = vadd.f32 %v233, %v245
    %248 = vrot.lane.b32.xlu0 %v72, 15
    %v249 = vpop.permute.xlu0 %248
    %251 = vrot.lane.b32.xlu0 %v52, 15
    %v252 = vpop.permute.xlu0 %251
    %vm253 = vcmask 121856
    %v254 = vsel %vm253, %v252, %v249
    %v257 = vsel %vm253, %v249, %v252
    %v258 = vmul.f32 %v118, %v257
    %v259 = vmul.f32 %v119, %v254
    %v260 = vadd.f32 %v246, %v258
    %v261 = vadd.f32 %v247, %v259
    %262 = vrot.lane.b32.xlu0 %v72, 1
    %v263 = vpop.permute.xlu0 %262
    %265 = vrot.lane.b32.xlu0 %v52, 1
    %v266 = vpop.permute.xlu0 %265
    %vm267 = vcmask 7168
    %v268 = vsel %vm267, %v266, %v263
    %v271 = vsel %vm267, %v263, %v266
    %v272 = vmul.f32 %v134, %v271
    %v273 = vmul.f32 %v135, %v268
    %v274 = vadd.f32 %v260, %v272
    %v275 = vadd.f32 %v261, %v273
    %276 = vrot.lane.b32.xlu0 %v52, 127
    %v277 = vpop.permute.xlu0 %276
    %278 = vrot.lane.b32.xlu0 %v72, 127
    %v279 = vpop.permute.xlu0 %278
    %vm280 = vcmask 1039360
    %v281 = vsel %vm280, %v277, %v279
    %v285 = vsel %vm280, %v279, %v277
    %v286 = vmul.f32 %v166, %v281
    %v287 = vmul.f32 %v167, %v285
    %v288 = vadd.f32 %v274, %v286
    %v289 = vadd.f32 %v275, %v287
    %290 = vrot.lane.b32.xlu0 %v52, 113
    %v291 = vpop.permute.xlu0 %290
    %292 = vrot.lane.b32.xlu0 %v72, 113
    %v293 = vpop.permute.xlu0 %292
    %vm294 = vcmask 924672
    %v295 = vsel %vm294, %v291, %v293
    %v299 = vsel %vm294, %v293, %v291
    %v300 = vmul.f32 %v182, %v295
    %v301 = vmul.f32 %v183, %v299
    %v302 = vadd.f32 %v288, %v300
    %v303 = vadd.f32 %v289, %v301
    %304 = vrot.lane.b32.xlu0 %v52, 112
    %v305 = vpop.permute.xlu0 %304
    %306 = vrot.lane.b32.xlu0 %v72, 112
    %v307 = vpop.permute.xlu0 %306
    %vm308 = vcmask 916480
    %v309 = vsel %vm308, %v305, %v307
    %v313 = vsel %vm308, %v307, %v305
    %v314 = vmul.f32 %v198, %v309
    %v315 = vmul.f32 %v199, %v313
    %v316 = vadd.f32 %v302, %v314
    %v317 = vadd.f32 %v303, %v315
    %318 = vrot.lane.b32.xlu0 %v52, 111
    %v319 = vpop.permute.xlu0 %318
    %320 = vrot.lane.b32.xlu0 %v72, 111
    %v321 = vpop.permute.xlu0 %320
    %vm322 = vcmask 908288
    %v323 = vsel %vm322, %v319, %v321
    %v327 = vsel %vm322, %v321, %v319
    %v328 = vmul.f32 %v214, %v323
    %v329 = vmul.f32 %v215, %v327
    %v330 = vadd.f32 %v316, %v328
    %v331 = vadd.f32 %v317, %v329
    %v332 = vld [vmem:[%s4] sm:$0xff]
    %v334 = vsel %vm30, %v332, 0
    %336 = vmatpush.msra.mxu0 0.0
    %337 = vmatpush.msra.mxu0 0.0
    %338 = vmatpush.msra.mxu0 0.0
    %339 = vmatpush.msra.mxu0 0.0
    %340 = vmatpush.msra.mxu0 0.0
    %341 = vmatpush.msra.mxu0 0.0
    %342 = vmatpush.msra.mxu0 0.0
    %343 = vmatpush.msra.mxu0 0.0
    %344 = vmatpush.msra.mxu0 0.0
    %345 = vmatpush.msra.mxu0 0.0
    %346 = vmatpush.msra.mxu0 0.0
    %347 = vmatpush.msra.mxu0 0.0
    %348 = vmatpush.msra.mxu0 0.0
    %349 = vmatpush.msra.mxu0 0.0
    %350 = vmatpush.msra.mxu0 0.0
    %351 = vmatpush.msra.mxu0 %v330
    %352 = vmatmul.f32.gmra.mxu0 %v334
    %v353 = vpop.f32.mrf.mxu0
    %v354 = vadd.f32 0.0, %v353
    %355 = vdwg.mxu0
    %356 = vmatpush.msra.mxu0 0.0
    %357 = vmatpush.msra.mxu0 0.0
    %358 = vmatpush.msra.mxu0 0.0
    %359 = vmatpush.msra.mxu0 0.0
    %360 = vmatpush.msra.mxu0 0.0
    %361 = vmatpush.msra.mxu0 0.0
    %362 = vmatpush.msra.mxu0 0.0
    %363 = vmatpush.msra.mxu0 0.0
    %364 = vmatpush.msra.mxu0 0.0
    %365 = vmatpush.msra.mxu0 0.0
    %366 = vmatpush.msra.mxu0 0.0
    %367 = vmatpush.msra.mxu0 0.0
    %368 = vmatpush.msra.mxu0 0.0
    %369 = vmatpush.msra.mxu0 0.0
    %370 = vmatpush.msra.mxu0 0.0
    %371 = vmatpush.msra.mxu0 %v331
    %372 = vmatmul.f32.gmra.mxu0 %v334
    %v373 = vpop.f32.mrf.mxu0
    %v374 = vadd.f32 0.0, %v373
    %375 = vdwg.mxu0
    %v376 = vadd.f32 %v354, %v374
    %377 = vadd.xlane.f32.xlu0 %v376
    %v378 = vpop.xlane.xlu0 %377
    %v379 = vmul.f32 %v378, 0.001953125
    %v380 = vsub.f32 %v330, %v379
    %v381 = vsub.f32 %v331, %v379
    %v382 = vmul.f32 %v380, %v380
    %v383 = vmul.f32 %v381, %v381
    %384 = vmatpush.msra.mxu0 0.0
    %385 = vmatpush.msra.mxu0 0.0
    %386 = vmatpush.msra.mxu0 0.0
    %387 = vmatpush.msra.mxu0 0.0
    %388 = vmatpush.msra.mxu0 0.0
    %389 = vmatpush.msra.mxu0 0.0
    %390 = vmatpush.msra.mxu0 0.0
    %391 = vmatpush.msra.mxu0 0.0
    %392 = vmatpush.msra.mxu0 0.0
    %393 = vmatpush.msra.mxu0 0.0
    %394 = vmatpush.msra.mxu0 0.0
    %395 = vmatpush.msra.mxu0 0.0
    %396 = vmatpush.msra.mxu0 0.0
    %397 = vmatpush.msra.mxu0 0.0
    %398 = vmatpush.msra.mxu0 0.0
    %399 = vmatpush.msra.mxu0 %v382
    %400 = vmatmul.f32.gmra.mxu0 %v334
    %v401 = vpop.f32.mrf.mxu0
    %v402 = vadd.f32 0.0, %v401
    %403 = vdwg.mxu0
    %404 = vmatpush.msra.mxu0 0.0
    %405 = vmatpush.msra.mxu0 0.0
    %406 = vmatpush.msra.mxu0 0.0
    %407 = vmatpush.msra.mxu0 0.0
    %408 = vmatpush.msra.mxu0 0.0
    %409 = vmatpush.msra.mxu0 0.0
    %410 = vmatpush.msra.mxu0 0.0
    %411 = vmatpush.msra.mxu0 0.0
    %412 = vmatpush.msra.mxu0 0.0
    %413 = vmatpush.msra.mxu0 0.0
    %414 = vmatpush.msra.mxu0 0.0
    %415 = vmatpush.msra.mxu0 0.0
    %416 = vmatpush.msra.mxu0 0.0
    %417 = vmatpush.msra.mxu0 0.0
    %418 = vmatpush.msra.mxu0 0.0
    %419 = vmatpush.msra.mxu0 %v383
    %420 = vmatmul.f32.gmra.mxu0 %v334
    %v421 = vpop.f32.mrf.mxu0
    %v422 = vadd.f32 0.0, %v421
    %423 = vdwg.mxu0
    %v424 = vadd.f32 %v402, %v422
    %425 = vadd.xlane.f32.xlu0 %v424
    %v426 = vpop.xlane.xlu0 %425
    %v427 = vmul.f32 %v426, 0.001953125
    %v428 = vadd.f32 %v427, 1e-05
    %v429 = vrsqrt.pop %v428
    %v430 = vmul.f32 %v429, %v428
    %v431 = vmul.f32 %v430, %v429
    %v432 = vmul.f32 0.5, %v431
    %v433 = vsub.f32 1.5, %v432
    %v434 = vmul.f32 %v429, %v433
    %vm435 = vweird.f32 %v428
    %vm436 = vweird.f32 %v429
    %vm437 = vmor %vm435, %vm436
    %v438 = vsel %vm437, %v429, %v434
    %v439 = vld [vmem:[%s5] sm:$0xff]
    %v440 = vmul.f32 %v438, %v439
    %442 = vset.pattern.permute.xlu0 0
    %443 = vperm.xlu0 %442, %v440
    %v444 = vpop.permute.xlu0 %443
    %v446 = vmul.f32 %v380, %v444
    %v447 = vmul.f32 %v381, %v444
    %v448 = vld [vmem:[%s6] sm:$0xff]
    %450 = vset.pattern.permute.xlu0 0
    %451 = vperm.xlu0 %450, %v448
    %v452 = vpop.permute.xlu0 %451
    %v454 = vadd.f32 %v446, %v452
    %v455 = vadd.f32 %v447, %v452
    %v456 = vmul.f32 %v454, 0.70710677
    %v457 = vmul.f32 %v455, 0.70710677
    %v458 = vand.u32 2147483647, %v456
    %v459 = vand.u32 2147483647, %v457
    %v460 = vmul.f32 %v458, 0.3275911
    %v461 = vmul.f32 %v459, 0.3275911
    %v462 = vadd.f32 %v460, 1.0
    %v463 = vadd.f32 %v461, 1.0
    %v464 = vrcp.pop %v462
    %v465 = vrcp.pop %v463
    %v466 = vmul.f32 %v464, 1.0614054
    %v467 = vmul.f32 %v465, 1.0614054
    %v468 = vadd.f32 %v466, -1.4531521
    %v469 = vadd.f32 %v467, -1.4531521
    %v470 = vmul.f32 %v468, %v464
    %v471 = vmul.f32 %v469, %v465
    %v472 = vadd.f32 %v470, 1.4214138
    %v473 = vadd.f32 %v471, 1.4214138
    %v474 = vmul.f32 %v472, %v464
    %v475 = vmul.f32 %v473, %v465
    %v476 = vadd.f32 %v474, -0.28449672
    %v477 = vadd.f32 %v475, -0.28449672
    %v478 = vmul.f32 %v476, %v464
    %v479 = vmul.f32 %v477, %v465
    %v480 = vadd.f32 %v478, 0.2548296
    %v481 = vadd.f32 %v479, 0.2548296
    %v482 = vmul.f32 %v480, %v464
    %v483 = vmul.f32 %v481, %v465
    %v484 = vsub.f32 0.0, %v458
    %v485 = vsub.f32 0.0, %v459
    %v486 = vmul.f32 %v484, %v458
    %v487 = vmul.f32 %v485, %v459
    %v488 = vmul.f32 %v486, 1.442695
    %v489 = vpow.pop %v488
    %v490 = vmul.f32 %v487, 1.442695
    %v491 = vpow.pop %v490
    %v492 = vmul.f32 %v482, %v489
    %v493 = vmul.f32 %v483, %v491
    %v494 = vsub.f32 1.0, %v492
    %v495 = vsub.f32 1.0, %v493
    %vm496 = vcmp.ge.f32.partialorder %v456, 0.0
    %vm497 = vcmp.ge.f32.partialorder %v457, 0.0
    %v498 = vsub.f32 0.0, %v494
    %v499 = vsub.f32 0.0, %v495
    %v500 = vsel %vm496, %v494, %v498
    %v501 = vsel %vm497, %v495, %v499
    %v502 = vmul.f32 %v454, 0.5
    %v503 = vmul.f32 %v455, 0.5
    %v504 = vmul.f32 %v502, %v500
    %v505 = vmul.f32 %v503, %v501
    %v506 = vadd.f32 %v502, %v504
    %v507 = vadd.f32 %v503, %v505
    %508 = vst [vmem:[#allocation2] sm:$0xff] %v506
    %509 = vst [vmem:[#allocation2 + $0x8] sm:$0xff] %v507
    // Predicated region
    $region30: #{tpu_custom_call.1} parent=1 // pred_check
      _
    $region31: #{tpu_custom_call.1} parent=1 // pred_check_branch
      %511 = sbr.rel (0) target = $region33
    $region32: #{tpu_custom_call.1} parent=1 // pred_region
      %513 = vsyncadd [#allocation3], 0
      %s515 = sshll.u32 [#allocation2], 4
      %s516 = int_to_ptr.vmem [resolvable:$true] %s515
      %s517 = sshll.u32 %s7, 4
      %s518 = int_to_ptr.hbm [resolvable:$true] %s517
      %520 = dma.vmem_to_hbm [thread:$0]  %s516, 256, %s518, [#allocation3]
    $region33: #{tpu_custom_call.1} parent=1 // pred_fallthru
      _
    // Predicated region
    $region34: #{tpu_custom_call.1} parent=1 // pred_check
      _
    $region35: #{tpu_custom_call.1} parent=1 // pred_check_branch
      %522 = sbr.rel (0) target = $region37
    $region36: #{tpu_custom_call.1} parent=1 // pred_region
      %524 = dma.done [#allocation3], 256
    $region37: #{tpu_custom_call.1} parent=1 // pred_fallthru
      _
    %525 = vsyncpa [#allocation3], 1

</llo_original>
